<compile_context>
chip_gen: v7x
topology: tpu7x:2x2x1
jax: 0.10.0
libtpu: 0.0.40
codegen_flags: <defaults>
</compile_context>

<pallas_src>
import jax
import jax.numpy as jnp
from jax import lax
from jax.experimental import pallas as pl
from jax.experimental.pallas import tpu as pltpu


_DEFAULT_DMA_DEPTH = 32              # in-flight row DMAs for the streamed path
_DEFAULT_ONEHOT_MAX_VOCAB = 2048     # one-hot MXU gather only below this vocab
_MIN_BLOCK_TOKENS = 128              # lane-aligned token blocks
_MAX_BLOCK_TOKENS = 1024             # keeps SMEM / one-hot temporaries bounded
_TARGET_OUT_TILE_BYTES = 1 << 20     # aim for ~1 MiB output tiles
_MAX_TOKENS_PER_CALL = 32768         # bounds the streamed path's SMEM prefetch


def _round_up(x: int, m: int) -> int:
    return ((x + m - 1) // m) * m


def _vmem_capacity_bytes() -> int:
    """Per-core VMEM capacity (generation-aware); conservative fallback."""
    try:
        cap = int(pltpu.get_tpu_info().vmem_capacity_bytes)
        if cap > 0:
            return cap
    except Exception:
        pass
    return 64 << 20  # v7x per-TensorCore size; safe lower bound everywhere


def _choose_block(n: int, emb: int, itemsize: int, vocab: int,
                  use_onehot: bool) -> int:
    """Token-block size: ~1 MiB output tile, multiple of 128, capped temporaries."""
    row_bytes = max(emb * itemsize, 1)
    blk = _TARGET_OUT_TILE_BYTES // row_bytes
    if use_onehot:
        # Keep the (block, vocab) one-hot temporary modest (<= ~4 MiB).
        blk = min(blk, max(_MIN_BLOCK_TOKENS, (4 << 20) // max(vocab * itemsize, 1)))
    blk = max(_MIN_BLOCK_TOKENS, min(_MAX_BLOCK_TOKENS, blk))
    blk = min(blk, _round_up(n, _MIN_BLOCK_TOKENS))
    return _round_up(blk, _MIN_BLOCK_TOKENS)


# --------------------------------------------------------------------------- #
# Path 1: small vocab -- table resident in VMEM, one-hot MXU gather.
# --------------------------------------------------------------------------- #
def _onehot_gather_kernel(tok_ref, table_ref, out_ref):
    # tok_ref:   (block, 1) int32 VMEM tile of token ids (values along sublanes)
    # table_ref: (vocab, emb) VMEM tile = full table (constant index_map -> resident)
    # out_ref:   (block, emb) VMEM output tile
    vocab = table_ref.shape[0]
    blk = out_ref.shape[0]
    col_ids = lax.broadcasted_iota(jnp.int32, (blk, vocab), 1)
    onehot = (tok_ref[...] == col_ids).astype(table_ref.dtype)      # (block, vocab)
    out_ref[...] = jnp.dot(
        onehot, table_ref[...], preferred_element_type=jnp.float32
    ).astype(out_ref.dtype)


def _embed_onehot(flat, weight, block, vmem_cap):
    n = flat.shape[0]
    vocab, emb = weight.shape
    itemsize = jnp.dtype(weight.dtype).itemsize

    n_pad = _round_up(n, block)
    if n_pad != n:
        flat = jnp.pad(flat, (0, n_pad - n))     # pads with token id 0
    n_blocks = n_pad // block
    tok2d = flat.reshape(n_pad, 1)

    table_bytes = vocab * emb * itemsize
    out_blk_bytes = block * emb * itemsize
    onehot_bytes = block * vocab * max(itemsize, 4)
    need = 2 * table_bytes + 2 * out_blk_bytes + 2 * onehot_bytes + (8 << 20)
    vmem_limit = int(min(max(need, 32 << 20), vmem_cap - (4 << 20)))

    out = pl.pallas_call(
        _onehot_gather_kernel,
        out_shape=jax.ShapeDtypeStruct((n_pad, emb), weight.dtype),
        grid=(n_blocks,),
        in_specs=[
            pl.BlockSpec((block, 1), lambda i: (i, 0)),
            # Constant index_map: the full table is DMA'd into VMEM once and stays
            # resident across all token blocks (per TensorCore under "parallel").
            pl.BlockSpec((vocab, emb), lambda i: (0, 0)),
        ],
        out_specs=pl.BlockSpec((block, emb), lambda i: (i, 0)),
        compiler_params=pltpu.CompilerParams(
            dimension_semantics=("parallel",),
            vmem_limit_bytes=vmem_limit,
        ),
    )(tok2d, weight)
    return out[:n] if n_pad != n else out


# --------------------------------------------------------------------------- #
# Path 2: large vocab -- table in HBM, ring of row DMAs straight into out_ref.
# --------------------------------------------------------------------------- #
def _streamed_gather_kernel(tok_ref, w_hbm_ref, out_ref, dma_sems):
    # tok_ref:   SMEM scalar-prefetch ref with all flat token ids of this chunk
    # w_hbm_ref: (vocab, emb) embedding table left in HBM (pl.ANY)
    # out_ref:   (block, emb) VMEM output tile -- rows are DMA'd directly into it
    # dma_sems:  (depth,) DMA semaphores for the in-flight ring
    blk = out_ref.shape[0]
    depth = dma_sems.shape[0]
    base = pl.program_id(0) * blk

    def issue(t, tok):
        pltpu.make_async_copy(
            w_hbm_ref.at[tok], out_ref.at[t], dma_sems.at[t % depth]
        ).start()

    def wait_slot(t):
        # Dummy src/dst: only the byte count matters for the wait, and every row
        # DMA in this kernel moves exactly emb*itemsize bytes (documented invariant
        # -- revisit if multi-row / variable-size DMAs are ever added).
        pltpu.make_async_copy(
            w_hbm_ref.at[0], out_ref.at[0], dma_sems.at[t % depth]
        ).wait()

    # Prime the ring with `depth` outstanding row fetches.
    @pl.loop(0, depth)
    def _(t):
        issue(t, tok_ref[base + t])

    # Steady state: read the next token id from SMEM *before* the wait (keeps
    # sst->sld forwarding), retire the oldest fetch, issue the next one.
    @pl.loop(depth, blk)
    def _(t):
        tok = tok_ref[base + t]
        wait_slot(t - depth)
        issue(t, tok)

    # Drain the last `depth` fetches so the block is complete before write-back.
    @pl.loop(blk - depth, blk)
    def _(t):
        wait_slot(t)


def _embed_streamed(flat, weight, block, dma_depth, vmem_cap):
    n = flat.shape[0]
    vocab, emb = weight.shape
    itemsize = jnp.dtype(weight.dtype).itemsize

    n_pad = _round_up(n, block)
    if n_pad != n:
        flat = jnp.pad(flat, (0, n_pad - n))     # pads with token id 0
    n_blocks = n_pad // block
    depth = max(1, min(dma_depth, block))

    out_blk_bytes = block * emb * itemsize
    vmem_limit = int(min(max(4 * out_blk_bytes + (16 << 20), 32 << 20),
                         vmem_cap - (4 << 20)))

    grid_spec = pltpu.PrefetchScalarGridSpec(
        num_scalar_prefetch=1,
        grid=(n_blocks,),
        in_specs=[pl.BlockSpec(memory_space=pl.ANY)],          # table stays in HBM
        out_specs=pl.BlockSpec((block, emb), lambda i, tok: (i, 0)),
        scratch_shapes=[pltpu.SemaphoreType.DMA((depth,))],
    )
    out = pl.pallas_call(
        _streamed_gather_kernel,
        out_shape=jax.ShapeDtypeStruct((n_pad, emb), weight.dtype),
        grid_spec=grid_spec,
        compiler_params=pltpu.CompilerParams(
            dimension_semantics=("parallel",),
            vmem_limit_bytes=vmem_limit,
        ),
    )(flat, weight)
    return out[:n] if n_pad != n else out


# --------------------------------------------------------------------------- #
# Wrapper
# --------------------------------------------------------------------------- #
def token_embedding(tokens: jax.Array,
                    weight: jax.Array,
                    *,
                    onehot_max_vocab: int = _DEFAULT_ONEHOT_MAX_VOCAB,
                    dma_depth: int = _DEFAULT_DMA_DEPTH,
                    max_tokens_per_call: int = _MAX_TOKENS_PER_CALL,
                    force_streamed: bool = False) -> jax.Array:
    """Pallas equivalent of nn.Embedding(vocab, emb, padding_idx).forward(tokens).

    tokens: integer array of any shape (e.g. [batch, seq])
    weight: [vocab_size, emb_size] table (padding row already zeroed)
    returns: tokens.shape + (emb_size,) array with weight's dtype.
    (Tip: storing `weight` in bf16 halves the memory-bound gather cost, esp. on v5e.)
    """
    assert weight.ndim == 2, "weight must be (vocab_size, emb_size)"
    orig_shape = tuple(tokens.shape)
    vocab, emb = weight.shape

    flat = tokens.reshape(-1).astype(jnp.int32)
    # PyTorch raises on out-of-range ids; we clamp instead of issuing an OOB DMA.
    flat = jnp.clip(flat, 0, vocab - 1)
    n = int(flat.shape[0])
    if n == 0:                                   # empty-token guard
        return jnp.zeros(orig_shape + (emb,), dtype=weight.dtype)

    itemsize = jnp.dtype(weight.dtype).itemsize
    vmem_cap = _vmem_capacity_bytes()

    use_onehot = (not force_streamed) and (vocab <= onehot_max_vocab)
    if use_onehot:
        block = _choose_block(n, emb, itemsize, vocab, True)
        need = (2 * vocab * emb * itemsize            # table (conservatively x2)
                + 2 * block * emb * itemsize          # double-buffered output tiles
                + 2 * block * vocab * max(itemsize, 4)  # one-hot temp + f32 acc
                + (8 << 20))
        # Per-core budget: with ("parallel",) each TensorCore (v7x has 2) holds its
        # own resident copy of the table, so compare against per-core capacity.
        use_onehot = need <= int(0.8 * vmem_cap)

    if use_onehot:
        out_flat = _embed_onehot(flat, weight, block, vmem_cap)
    else:
        block = _choose_block(n, emb, itemsize, vocab, False)
        if n <= max_tokens_per_call:
            out_flat = _embed_streamed(flat, weight, block, dma_depth, vmem_cap)
        else:
            # Chunk over the token axis only to bound the SMEM scalar-prefetch size.
            pieces = [
                _embed_streamed(flat[s:s + max_tokens_per_call], weight, block,
                                dma_depth, vmem_cap)
                for s in range(0, n, max_tokens_per_call)
            ]
            out_flat = jnp.concatenate(pieces, axis=0)

    return out_flat.reshape(orig_shape + (emb,))


def init_token_embedding_params(key, vocab_size, emb_size, padding_idx):
    """nn.Embedding-style init: N(0, 1), padding row zeroed."""
    w = jax.random.normal(key, (vocab_size, emb_size), dtype=jnp.float32)
    w = w.at[padding_idx].set(0.0)
    return w


if __name__ == "__main__":
    key = jax.random.PRNGKey(0)
    k_w1, k_t1, k_w2, k_t2 = jax.random.split(key, 4)

    # --- Small-vocab config: exercises the one-hot MXU resident path. ---
    vocab_size, emb_size, padding_idx = 32, 128, 0
    batch, seq = 2, 8
    weight = init_token_embedding_params(k_w1, vocab_size, emb_size, padding_idx)
    tokens = jax.random.randint(k_t1, (batch, seq), 0, vocab_size, dtype=jnp.int32)
    tokens = tokens.at[0, 0].set(padding_idx)      # ensure a padding token appears
    ref = weight[tokens]                           # plain-JAX reference

    out = jax.block_until_ready(token_embedding(tokens, weight))
    assert out.shape == (batch, seq, emb_size)
    assert jnp.allclose(out, ref, atol=1e-5), "one-hot resident path mismatch"
    assert jnp.all(out[0, 0] == 0.0), "padding_idx row should be zero"

    # Same inputs through the streamed HBM row-DMA path (forced) for coverage.
    out_s = jax.block_until_ready(token_embedding(tokens, weight, force_streamed=True))
    assert jnp.allclose(out_s, ref), "streamed path mismatch (forced)"
    assert jnp.all(out_s[0, 0] == 0.0), "padding_idx row should be zero (streamed)"

    # --- Larger-vocab config: routes to the streamed path naturally. ---
    vocab2, emb2 = 4096, 256
    batch2, seq2 = 2, 64
    weight2 = init_token_embedding_params(k_w2, vocab2, emb2, padding_idx)
    tokens2 = jax.random.randint(k_t2, (batch2, seq2), 0, vocab2, dtype=jnp.int32)
    tokens2 = tokens2.at[1, 3].set(padding_idx)
    ref2 = weight2[tokens2]
    out2 = jax.block_until_ready(token_embedding(tokens2, weight2))
    assert out2.shape == (batch2, seq2, emb2)
    assert jnp.allclose(out2, ref2), "streamed path mismatch (large vocab)"

    # Empty-token edge case (previously divided by zero).
    empty_tokens = jnp.zeros((2, 0), dtype=jnp.int32)
    out_e = jax.block_until_ready(token_embedding(empty_tokens, weight))
    assert out_e.shape == (2, 0, emb_size)

    print("KERNEL_OK")
</pallas_src>

<mosaic_0001>
module attributes {stable_mosaic.version = 11 : i64} {
  func.func @_onehot_gather_kernel(%arg0: i32, %arg1: memref<128x1xi32, #tpu.memory_space<vmem>>, %arg2: memref<32x128xf32, #tpu.memory_space<vmem>>, %arg3: memref<128x128xf32, #tpu.memory_space<vmem>>) attributes {dimension_semantics = [#tpu.dimension_semantics<parallel>], iteration_bounds = array<i64: 1>, scalar_prefetch = 0 : i64, scratch_operands = 0 : i64, tpu.core_type = #tpu.core_type<tc>, window_params = [{transform_indices = @transform_0, window_bounds = array<i64: 128, 1>}, {pipeline_mode = #tpu.pipeline_mode<synchronous>, transform_indices = @transform_1, window_bounds = array<i64: 32, 128>}, {transform_indices = @transform_2, window_bounds = array<i64: 128, 128>}]} {
    %0 = tpu.iota {dimensions = array<i32: 1>} : vector<128x32xi32>
    %c0 = arith.constant 0 : index
    %c0_0 = arith.constant 0 : index
    %1 = vector.load %arg1[%c0, %c0_0] : memref<128x1xi32, #tpu.memory_space<vmem>>, vector<128x1xi32>
    %2 = vector.broadcast %1 : vector<128x1xi32> to vector<128x32xi32>
    %3 = arith.cmpi eq, %2, %0 : vector<128x32xi32>
    %4 = arith.extui %3 : vector<128x32xi1> to vector<128x32xi32>
    %5 = arith.sitofp %4 : vector<128x32xi32> to vector<128x32xf32>
    %c0_1 = arith.constant 0 : index
    %c0_2 = arith.constant 0 : index
    %6 = vector.load %arg2[%c0_1, %c0_2] : memref<32x128xf32, #tpu.memory_space<vmem>>, vector<32x128xf32>
    %cst = arith.constant dense<0.000000e+00> : vector<128x128xf32>
    %7 = tpu.matmul %5, %6, %cst {dimension_numbers = #tpu.dot_dimension_numbers<[1], [0], [0], [1], [0, 0, 1, 1], [], []>} : vector<128x32xf32>, vector<32x128xf32>, vector<128x128xf32> -> vector<128x128xf32>
    %c0_3 = arith.constant 0 : index
    %c0_4 = arith.constant 0 : index
    %8 = vector.load %arg3[%c0_3, %c0_4] : memref<128x128xf32, #tpu.memory_space<vmem>>, vector<128x128xf32>
    tpu.vector_store %arg3[%c0_3, %c0_4], %7 {strides = array<i32>} : memref<128x128xf32, #tpu.memory_space<vmem>>, vector<128x128xf32>,
    return
  }
  func.func @transform_0(%arg0: i32) -> (i32, i32) {
    %c0_i32 = arith.constant 0 : i32
    %c0_i32_0 = arith.constant 0 : i32
    return %arg0, %c0_i32 : i32, i32
  }
  func.func @transform_1(%arg0: i32) -> (i32, i32) {
    %c0_i32 = arith.constant 0 : i32
    %c0_i32_0 = arith.constant 0 : i32
    %c0_i32_1 = arith.constant 0 : i32
    return %c0_i32, %c0_i32_0 : i32, i32
  }
  func.func @transform_2(%arg0: i32) -> (i32, i32) {
    %c0_i32 = arith.constant 0 : i32
    %c0_i32_0 = arith.constant 0 : i32
    return %arg0, %c0_i32 : i32, i32
  }
}

</mosaic_0001>

<llo_original>
// kernel: tpu_custom_call.1
$region0: #{tpu_custom_call.1}
  #allocation0 [shape = 'u32[]', space=smem, size = 0x4, offset = 0x4, fixed_abs, tag = 'smem constant byte address 0x4 - core index']
  #allocation1 [shape = 'u32[144,128]{1,0:T(1,128)}', space=vmem, size = 0x12000, scoped, tag = 'internal scratch']
  %s0 = inlined_call_operand.vmem [shape: s32[128,1], index: 0, kind: input, shape index: {}]
  %s1 = inlined_call_operand.vmem [shape: f32[32,128], index: 1, kind: input, shape index: {}]
  %s2 = inlined_call_operand.hbm [shape: f32[128,128], index: 2, kind: output, shape index: {}]
  %s3 = sld [smem:[#allocation0]]
  $region18: #{tpu_custom_call.1} parent=0
    _
  %s5 = ssub.s32 1, %s3
  %s6 = scalar_select 0, %s5, %s3
  $region1: #{tpu_custom_call.1} parent=0
    #allocation2 [shape = 'u8[65536]{0}', space=vmem, size = 0x10000, scoped, tag = 'output window, operand 0, single buffered']
    #allocation3 [shape = 's32[1]{0}', space=sflag, size = 0x4, scoped, tag = 'scoped memory for tpu_custom_call.1']
    %7 = vsyncpa [#allocation3], 0
    // Predicated region
    $region2: #{tpu_custom_call.1} parent=1 // pred_check
      _
    $region3: #{tpu_custom_call.1} parent=1 // pred_check_branch
      %9 = sbr.rel (0) target = $region5
    $region4: #{tpu_custom_call.1} parent=1 // pred_region
      _
    $region5: #{tpu_custom_call.1} parent=1 // pred_fallthru
      _
    // Predicated region
    $region6: #{tpu_custom_call.1} parent=1 // pred_check
      _
    $region7: #{tpu_custom_call.1} parent=1 // pred_check_branch
      %11 = sbr.rel (0) target = $region9
    $region8: #{tpu_custom_call.1} parent=1 // pred_region
      _
    $region9: #{tpu_custom_call.1} parent=1 // pred_fallthru
      _
    %v12 = vlaneseq
    %v13 = vand.u32 %v12, 127
    %v14 = vld [vmem:[%s0] sm:$0xff]
    %v15 = vld [vmem:[%s0 + $0x8] sm:$0xff]
    %v16 = vld [vmem:[%s0 + $0x10] sm:$0xff]
    %v17 = vld [vmem:[%s0 + $0x18] sm:$0xff]
    %v18 = vld [vmem:[%s0 + $0x20] sm:$0xff]
    %v19 = vld [vmem:[%s0 + $0x28] sm:$0xff]
    %v20 = vld [vmem:[%s0 + $0x30] sm:$0xff]
    %v21 = vld [vmem:[%s0 + $0x38] sm:$0xff]
    %v22 = vld [vmem:[%s0 + $0x40] sm:$0xff]
    %v23 = vld [vmem:[%s0 + $0x48] sm:$0xff]
    %v24 = vld [vmem:[%s0 + $0x50] sm:$0xff]
    %v25 = vld [vmem:[%s0 + $0x58] sm:$0xff]
    %v26 = vld [vmem:[%s0 + $0x60] sm:$0xff]
    %v27 = vld [vmem:[%s0 + $0x68] sm:$0xff]
    %v28 = vld [vmem:[%s0 + $0x70] sm:$0xff]
    %v29 = vld [vmem:[%s0 + $0x78] sm:$0xff]
    %30 = vset.pattern.permute.xlu0 0
    %31 = vperm.xlu0 %30, %v14
    %v32 = vpop.permute.xlu0 %31
    %33 = vset.pattern.permute.xlu0 0
    %34 = vperm.xlu0 %33, %v15
    %v35 = vpop.permute.xlu0 %34
    %36 = vset.pattern.permute.xlu0 0
    %37 = vperm.xlu0 %36, %v16
    %v38 = vpop.permute.xlu0 %37
    %39 = vset.pattern.permute.xlu0 0
    %40 = vperm.xlu0 %39, %v17
    %v41 = vpop.permute.xlu0 %40
    %42 = vset.pattern.permute.xlu0 0
    %43 = vperm.xlu0 %42, %v18
    %v44 = vpop.permute.xlu0 %43
    %45 = vset.pattern.permute.xlu0 0
    %46 = vperm.xlu0 %45, %v19
    %v47 = vpop.permute.xlu0 %46
    %48 = vset.pattern.permute.xlu0 0
    %49 = vperm.xlu0 %48, %v20
    %v50 = vpop.permute.xlu0 %49
    %51 = vset.pattern.permute.xlu0 0
    %52 = vperm.xlu0 %51, %v21
    %v53 = vpop.permute.xlu0 %52
    %54 = vset.pattern.permute.xlu0 0
    %55 = vperm.xlu0 %54, %v22
    %v56 = vpop.permute.xlu0 %55
    %57 = vset.pattern.permute.xlu0 0
    %58 = vperm.xlu0 %57, %v23
    %v59 = vpop.permute.xlu0 %58
    %60 = vset.pattern.permute.xlu0 0
    %61 = vperm.xlu0 %60, %v24
    %v62 = vpop.permute.xlu0 %61
    %63 = vset.pattern.permute.xlu0 0
    %64 = vperm.xlu0 %63, %v25
    %v65 = vpop.permute.xlu0 %64
    %66 = vset.pattern.permute.xlu0 0
    %67 = vperm.xlu0 %66, %v26
    %v68 = vpop.permute.xlu0 %67
    %69 = vset.pattern.permute.xlu0 0
    %70 = vperm.xlu0 %69, %v27
    %v71 = vpop.permute.xlu0 %70
    %72 = vset.pattern.permute.xlu0 0
    %73 = vperm.xlu0 %72, %v28
    %v74 = vpop.permute.xlu0 %73
    %75 = vset.pattern.permute.xlu0 0
    %76 = vperm.xlu0 %75, %v29
    %v77 = vpop.permute.xlu0 %76
    %vm78 = vcmp.eq.s32.totalorder %v32, %v13
    %vm79 = vcmp.eq.s32.totalorder %v35, %v13
    %vm80 = vcmp.eq.s32.totalorder %v38, %v13
    %vm81 = vcmp.eq.s32.totalorder %v41, %v13
    %vm82 = vcmp.eq.s32.totalorder %v44, %v13
    %vm83 = vcmp.eq.s32.totalorder %v47, %v13
    %vm84 = vcmp.eq.s32.totalorder %v50, %v13
    %vm85 = vcmp.eq.s32.totalorder %v53, %v13
    %vm86 = vcmp.eq.s32.totalorder %v56, %v13
    %vm87 = vcmp.eq.s32.totalorder %v59, %v13
    %vm88 = vcmp.eq.s32.totalorder %v62, %v13
    %vm89 = vcmp.eq.s32.totalorder %v65, %v13
    %vm90 = vcmp.eq.s32.totalorder %v68, %v13
    %vm91 = vcmp.eq.s32.totalorder %v71, %v13
    %vm92 = vcmp.eq.s32.totalorder %v74, %v13
    %vm93 = vcmp.eq.s32.totalorder %v77, %v13
    %v94 = vsel %vm78, 1, 0
    %v95 = vsel %vm79, 1, 0
    %v96 = vsel %vm80, 1, 0
    %v97 = vsel %vm81, 1, 0
    %v98 = vsel %vm82, 1, 0
    %v99 = vsel %vm83, 1, 0
    %v100 = vsel %vm84, 1, 0
    %v101 = vsel %vm85, 1, 0
    %v102 = vsel %vm86, 1, 0
    %v103 = vsel %vm87, 1, 0
    %v104 = vsel %vm88, 1, 0
    %v105 = vsel %vm89, 1, 0
    %v106 = vsel %vm90, 1, 0
    %v107 = vsel %vm91, 1, 0
    %v108 = vsel %vm92, 1, 0
    %v109 = vsel %vm93, 1, 0
    %v110 = vcvt.s32.f32 %v94
    %v111 = vcvt.s32.f32 %v95
    %v112 = vcvt.s32.f32 %v96
    %v113 = vcvt.s32.f32 %v97
    %v114 = vcvt.s32.f32 %v98
    %v115 = vcvt.s32.f32 %v99
    %v116 = vcvt.s32.f32 %v100
    %v117 = vcvt.s32.f32 %v101
    %v118 = vcvt.s32.f32 %v102
    %v119 = vcvt.s32.f32 %v103
    %v120 = vcvt.s32.f32 %v104
    %v121 = vcvt.s32.f32 %v105
    %v122 = vcvt.s32.f32 %v106
    %v123 = vcvt.s32.f32 %v107
    %v124 = vcvt.s32.f32 %v108
    %v125 = vcvt.s32.f32 %v109
    %v126 = vld [vmem:[%s1] sm:$0xff]
    %v127 = vld [vmem:[%s1 + $0x8] sm:$0xff]
    %v128 = vld [vmem:[%s1 + $0x10] sm:$0xff]
    %v129 = vld [vmem:[%s1 + $0x18] sm:$0xff]
    %vm130 = vcmask 261120
    %v132 = vsel %vm130, %v110, 0
    %v135 = vsel %vm130, %v111, 0
    %v138 = vsel %vm130, %v112, 0
    %v141 = vsel %vm130, %v113, 0
    %v144 = vsel %vm130, %v114, 0
    %v147 = vsel %vm130, %v115, 0
    %v150 = vsel %vm130, %v116, 0
    %v153 = vsel %vm130, %v117, 0
    %v156 = vsel %vm130, %v118, 0
    %v159 = vsel %vm130, %v119, 0
    %v162 = vsel %vm130, %v120, 0
    %v165 = vsel %vm130, %v121, 0
    %v168 = vsel %vm130, %v122, 0
    %v171 = vsel %vm130, %v123, 0
    %v174 = vsel %vm130, %v124, 0
    %v177 = vsel %vm130, %v125, 0
    %179 = vmatprep.subr.mxu0 0.0
    %180 = vmatpush1.msra.mxu0 %v126
    %181 = vmatprep.subr.mxu0 0.0
    %182 = vmatpush1.msra.mxu0 %v127
    %183 = vmatprep.subr.mxu0 0.0
    %184 = vmatpush1.msra.mxu0 %v128
    %185 = vmatprep.subr.mxu0 0.0
    %186 = vmatpush1.msra.mxu0 %v129
    %187 = vmatprep.subr.mxu0 0.0
    %188 = vmatpush1.msra.mxu0 0.0
    %189 = vmatprep.subr.mxu0 0.0
    %190 = vmatpush1.msra.mxu0 0.0
    %191 = vmatprep.subr.mxu0 0.0
    %192 = vmatpush1.msra.mxu0 0.0
    %193 = vmatprep.subr.mxu0 0.0
    %194 = vmatpush1.msra.mxu0 0.0
    %195 = vmatprep.subr.mxu0 0.0
    %196 = vmatpush1.msra.mxu0 0.0
    %197 = vmatprep.subr.mxu0 0.0
    %198 = vmatpush1.msra.mxu0 0.0
    %199 = vmatprep.subr.mxu0 0.0
    %200 = vmatpush1.msra.mxu0 0.0
    %201 = vmatprep.subr.mxu0 0.0
    %202 = vmatpush1.msra.mxu0 0.0
    %203 = vmatprep.subr.mxu0 0.0
    %204 = vmatpush1.msra.mxu0 0.0
    %205 = vmatprep.subr.mxu0 0.0
    %206 = vmatpush1.msra.mxu0 0.0
    %207 = vmatprep.subr.mxu0 0.0
    %208 = vmatpush1.msra.mxu0 0.0
    %209 = vmatprep.subr.mxu0 0.0
    %210 = vmatpush1.msra.mxu0 0.0
    %211 = vmatprep.subr.mxu0 0.0
    %212 = vmatpush1.msra.mxu0 0.0
    %213 = vmatprep.subr.mxu0 0.0
    %214 = vmatpush1.msra.mxu0 0.0
    %215 = vmatprep.subr.mxu0 0.0
    %216 = vmatpush1.msra.mxu0 0.0
    %217 = vmatprep.subr.mxu0 0.0
    %218 = vmatpush1.msra.mxu0 0.0
    %219 = vmatprep.subr.mxu0 0.0
    %220 = vmatpush1.msra.mxu0 0.0
    %221 = vmatprep.subr.mxu0 0.0
    %222 = vmatpush1.msra.mxu0 0.0
    %223 = vmatprep.subr.mxu0 0.0
    %224 = vmatpush1.msra.mxu0 0.0
    %225 = vmatprep.subr.mxu0 0.0
    %226 = vmatpush1.msra.mxu0 0.0
    %227 = vmatprep.subr.mxu0 0.0
    %228 = vmatpush1.msra.mxu0 0.0
    %229 = vmatprep.subr.mxu0 0.0
    %230 = vmatpush1.msra.mxu0 0.0
    %231 = vmatprep.subr.mxu0 0.0
    %232 = vmatpush1.msra.mxu0 0.0
    %233 = vmatprep.subr.mxu0 0.0
    %234 = vmatpush1.msra.mxu0 0.0
    %235 = vmatprep.subr.mxu0 0.0
    %236 = vmatpush1.msra.mxu0 0.0
    %237 = vmatprep.subr.mxu0 0.0
    %238 = vmatpush1.msra.mxu0 0.0
    %239 = vmatprep.subr.mxu0 0.0
    %240 = vmatpush1.msra.mxu0 0.0
    %241 = vmatprep.subr.mxu0 0.0
    %242 = vmatpush1.msra.mxu0 0.0
    %243 = vmatprep.mubr.f32.mxu0 0.0
    %244 = vmatmul.mubr.f32.gmra.mrb[0].mxu0 %v132
    %v245 = vpop.f32.mrb[0].mxu0
    %v246 = vadd.f32 0.0, %v245
    %v247 = vpop.f32.mrb[0].mxu0
    %248 = vmatprep.mubr.f32.mxu0 0.0
    %249 = vmatmul.mubr.f32.gmra.mrb[0].mxu0 %v135
    %v250 = vpop.f32.mrb[0].mxu0
    %v251 = vadd.f32 0.0, %v250
    %v252 = vpop.f32.mrb[0].mxu0
    %253 = vmatprep.mubr.f32.mxu0 0.0
    %254 = vmatmul.mubr.f32.gmra.mrb[0].mxu0 %v138
    %v255 = vpop.f32.mrb[0].mxu0
    %v256 = vadd.f32 0.0, %v255
    %v257 = vpop.f32.mrb[0].mxu0
    %258 = vmatprep.mubr.f32.mxu0 0.0
    %259 = vmatmul.mubr.f32.gmra.mrb[0].mxu0 %v141
    %v260 = vpop.f32.mrb[0].mxu0
    %v261 = vadd.f32 0.0, %v260
    %v262 = vpop.f32.mrb[0].mxu0
    %263 = vmatprep.mubr.f32.mxu0 0.0
    %264 = vmatmul.mubr.f32.gmra.mrb[0].mxu0 %v144
    %v265 = vpop.f32.mrb[0].mxu0
    %v266 = vadd.f32 0.0, %v265
    %v267 = vpop.f32.mrb[0].mxu0
    %268 = vmatprep.mubr.f32.mxu0 0.0
    %269 = vmatmul.mubr.f32.gmra.mrb[0].mxu0 %v147
    %v270 = vpop.f32.mrb[0].mxu0
    %v271 = vadd.f32 0.0, %v270
    %v272 = vpop.f32.mrb[0].mxu0
    %273 = vmatprep.mubr.f32.mxu0 0.0
    %274 = vmatmul.mubr.f32.gmra.mrb[0].mxu0 %v150
    %v275 = vpop.f32.mrb[0].mxu0
    %v276 = vadd.f32 0.0, %v275
    %v277 = vpop.f32.mrb[0].mxu0
    %278 = vmatprep.mubr.f32.mxu0 0.0
    %279 = vmatmul.mubr.f32.gmra.mrb[0].mxu0 %v153
    %v280 = vpop.f32.mrb[0].mxu0
    %v281 = vadd.f32 0.0, %v280
    %v282 = vpop.f32.mrb[0].mxu0
    %283 = vmatprep.mubr.f32.mxu0 0.0
    %284 = vmatmul.mubr.f32.gmra.mrb[0].mxu0 %v156
    %v285 = vpop.f32.mrb[0].mxu0
    %v286 = vadd.f32 0.0, %v285
    %v287 = vpop.f32.mrb[0].mxu0
    %288 = vmatprep.mubr.f32.mxu0 0.0
    %289 = vmatmul.mubr.f32.gmra.mrb[0].mxu0 %v159
    %v290 = vpop.f32.mrb[0].mxu0
    %v291 = vadd.f32 0.0, %v290
    %v292 = vpop.f32.mrb[0].mxu0
    %293 = vmatprep.mubr.f32.mxu0 0.0
    %294 = vmatmul.mubr.f32.gmra.mrb[0].mxu0 %v162
    %v295 = vpop.f32.mrb[0].mxu0
    %v296 = vadd.f32 0.0, %v295
    %v297 = vpop.f32.mrb[0].mxu0
    %298 = vmatprep.mubr.f32.mxu0 0.0
    %299 = vmatmul.mubr.f32.gmra.mrb[0].mxu0 %v165
    %v300 = vpop.f32.mrb[0].mxu0
    %v301 = vadd.f32 0.0, %v300
    %v302 = vpop.f32.mrb[0].mxu0
    %303 = vmatprep.mubr.f32.mxu0 0.0
    %304 = vmatmul.mubr.f32.gmra.mrb[0].mxu0 %v168
    %v305 = vpop.f32.mrb[0].mxu0
    %v306 = vadd.f32 0.0, %v305
    %v307 = vpop.f32.mrb[0].mxu0
    %308 = vmatprep.mubr.f32.mxu0 0.0
    %309 = vmatmul.mubr.f32.gmra.mrb[0].mxu0 %v171
    %v310 = vpop.f32.mrb[0].mxu0
    %v311 = vadd.f32 0.0, %v310
    %v312 = vpop.f32.mrb[0].mxu0
    %313 = vmatprep.mubr.f32.mxu0 0.0
    %314 = vmatmul.mubr.f32.gmra.mrb[0].mxu0 %v174
    %v315 = vpop.f32.mrb[0].mxu0
    %v316 = vadd.f32 0.0, %v315
    %v317 = vpop.f32.mrb[0].mxu0
    %318 = vmatprep.mubr.f32.mxu0 0.0
    %319 = vmatmul.mubr.f32.gmra.mrb[0].mxu0 %v177
    %v320 = vpop.f32.mrb[0].mxu0
    %v321 = vadd.f32 0.0, %v320
    %v322 = vpop.f32.mrb[0].mxu0
    %323 = vdwg.mxu0
    %324 = vst [vmem:[#allocation2] sm:$0xff] %v246
    %325 = vst [vmem:[#allocation2 + $0x8] sm:$0xff] %v251
    %326 = vst [vmem:[#allocation2 + $0x10] sm:$0xff] %v256
    %327 = vst [vmem:[#allocation2 + $0x18] sm:$0xff] %v261
    %328 = vst [vmem:[#allocation2 + $0x20] sm:$0xff] %v266
    %329 = vst [vmem:[#allocation2 + $0x28] sm:$0xff] %v271
    %330 = vst [vmem:[#allocation2 + $0x30] sm:$0xff] %v276
    %331 = vst [vmem:[#allocation2 + $0x38] sm:$0xff] %v281
    %332 = vst [vmem:[#allocation2 + $0x40] sm:$0xff] %v286
    %333 = vst [vmem:[#allocation2 + $0x48] sm:$0xff] %v291
    %334 = vst [vmem:[#allocation2 + $0x50] sm:$0xff] %v296
    %335 = vst [vmem:[#allocation2 + $0x58] sm:$0xff] %v301
    %336 = vst [vmem:[#allocation2 + $0x60] sm:$0xff] %v306
    %337 = vst [vmem:[#allocation2 + $0x68] sm:$0xff] %v311
    %338 = vst [vmem:[#allocation2 + $0x70] sm:$0xff] %v316
    %339 = vst [vmem:[#allocation2 + $0x78] sm:$0xff] %v321
    // Predicated region
    $region10: #{tpu_custom_call.1} parent=1 // pred_check
      _
    $region11: #{tpu_custom_call.1} parent=1 // pred_check_branch
      %341 = sbr.rel (0) target = $region13
    $region12: #{tpu_custom_call.1} parent=1 // pred_region
      %s343 = ssub.s32 2048, 2048
      %344 = vsyncadd [#allocation3], %s343
      %s345 = sshll.u32 [#allocation2], 4
      %s346 = int_to_ptr.vmem [resolvable:$true] %s345
      %351 = dma.vmem_to_hbm [thread:$0]  %s346, 2048, %s2, [#allocation3], 128, 128, 8
    $region13: #{tpu_custom_call.1} parent=1 // pred_fallthru
      _
    // Predicated region
    $region14: #{tpu_custom_call.1} parent=1 // pred_check
      _
    $region15: #{tpu_custom_call.1} parent=1 // pred_check_branch
      %353 = sbr.rel (0) target = $region17
    $region16: #{tpu_custom_call.1} parent=1 // pred_region
      %354 = dma.done [#allocation3], 2048
    $region17: #{tpu_custom_call.1} parent=1 // pred_fallthru
      _
    %355 = vsyncpa [#allocation3], 1

</llo_original>
